<compile_context>
chip_gen: v7x
topology: tpu7x:2x2x1
jax: 0.10.0
libtpu: 0.0.40
codegen_flags: <defaults>
</compile_context>

<pallas_src>
import functools

import jax
import jax.numpy as jnp
from jax import lax
from jax.experimental import pallas as pl
from jax.experimental.pallas import tpu as pltpu


def _residual_block_kernel(x_ref, w1_ref, w2_ref, shift_ref, o_ref, *, bt, unroll):
    """One (batch-tile, lane-tile) step of the fused residual MLP block.

    x_ref    : (Bt, C, TL) f32   input slab (channels on sublanes, L on lanes)
    w1_ref   : (C, C)      bf16  conv1 weight with BN1 scale folded in (rows=out_c)
    w2_ref   : (C, C)      bf16  conv2 weight with BN2 scale folded in
    shift_ref: (C, 2)      f32   per-channel shifts [t1 | t2] (BN beta/mean + bias)
    o_ref    : (Bt, C, TL) f32   output slab
    """
    # Hoisted once per grid step (not per row): broadcasts are not CSE'd by JAX.
    t1 = shift_ref[:, 0:1]            # (C, 1) -> broadcast along lanes
    t2 = shift_ref[:, 1:2]
    w1 = w1_ref[...]
    w2 = w2_ref[...]

    def body(b, carry):
        # --- branch layer 1: conv(k=1) * BN-scale (pre-folded) -> +shift -> LeakyReLU(0.2)
        h = jnp.dot(w1, x_ref[b].astype(jnp.bfloat16),
                    preferred_element_type=jnp.float32)        # (C, TL) f32 accum
        h = h + t1
        h = jnp.where(h > 0, h, 0.2 * h)
        # Dropout(p=0.25) is identity in inference mode.

        # --- branch layer 2 ---
        g = jnp.dot(w2, h.astype(jnp.bfloat16),
                    preferred_element_type=jnp.float32)
        g = g + t2
        g = jnp.where(g > 0, g, 0.2 * g)
        # Dropout(p=0.25) is identity in inference mode.

        # --- residual: re-read x row from VMEM (cheap vld, frees x's vregs earlier)
        o_ref[b] = (x_ref[b] + g).astype(o_ref.dtype)
        return carry

    if bt == 1:
        body(0, 0)
    else:
        # fori_loop bounds the per-row live range; partial unroll gives the LLO
        # scheduler cross-iteration visibility without blowing up code size.
        lax.fori_loop(0, bt, body, 0, unroll=unroll)


def _fold_bn(conv_b, gamma, beta, mean, var, eps=1e-5):
    """Fold BatchNorm1d (running stats) + conv bias into per-channel scale/shift."""
    inv_std = 1.0 / jnp.sqrt(var + eps)
    scale = gamma * inv_std                        # (C,)
    shift = beta + (conv_b - mean) * scale         # (C,)
    return scale, shift


def _pick_lane_tile(L_pad, max_tl):
    """Largest multiple of 128 that divides L_pad and is <= max_tl (>= 128)."""
    best = 128
    t = 128
    cap = min(max_tl, L_pad)
    while t <= cap:
        if L_pad % t == 0:
            best = t
        t += 128
    return best


def _pick_tiles(N, L_pad, C, max_tl, target_block_bytes, min_steps):
    """Pick (batch_tile, lane_tile).

    Priorities: (1) keep >= min_steps pipelined grid steps so DMA is hidden
    (and both v7x TCs have work), (2) grow the per-step block towards
    target_block_bytes by tiling the batch dim (amortizes the ~0.35us/step
    overhead in this HBM-bound regime), (3) never exceed the byte budget so
    double-buffered in+out slabs stay comfortably inside scoped VMEM.
    """
    min_steps = max(1, min_steps)
    tl = _pick_lane_tile(L_pad, max_tl)
    # Shrink the lane tile while even Bt == 1 leaves too few grid steps.
    while tl > 128 and N * (L_pad // tl) < min_steps:
        smaller = _pick_lane_tile(L_pad, tl - 128)
        if smaller == tl:
            break
        tl = smaller

    row_bytes = C * tl * 4                                   # one f32 batch row
    bt_cap_bytes = max(1, target_block_bytes // row_bytes)
    bt_cap_steps = max(1, (N * (L_pad // tl)) // min_steps)
    cap = min(bt_cap_bytes, bt_cap_steps, N)
    bt = 1
    for d in range(1, N + 1):                                # largest divisor of N <= cap
        if N % d == 0 and d <= cap:
            bt = d
    return bt, tl


@functools.partial(
    jax.jit, static_argnames=("max_tl", "target_block_bytes", "min_steps"))
def linear_block_forward(x, params, max_tl=512,
                         target_block_bytes=2 * 1024 * 1024, min_steps=16):
    """x: (N, C, L) float32, NCL layout (PyTorch Conv1d convention)."""
    N, C, L = x.shape

    w1, b1, g1, be1, m1, v1, w2, b2, g2, be2, m2, v2 = params
    s1, t1 = _fold_bn(b1, g1, be1, m1, v1)
    s2, t2 = _fold_bn(b2, g2, be2, m2, v2)

    # Conv1d k=1 weight (out_c, in_c, 1) -> (out_c, in_c); fold BN scale into
    # the rows (output channels), then cast to bf16 once (MXU-native operand).
    w1s = (w1.reshape(C, C) * s1[:, None]).astype(jnp.bfloat16)
    w2s = (w2.reshape(C, C) * s2[:, None]).astype(jnp.bfloat16)

    # Pack both shifts into a single (C, 2) f32 array: one input, one DMA.
    shifts = jnp.stack([t1, t2], axis=1).astype(jnp.float32)

    # Keep the lane (last) dim a multiple of 128 so every block store is an
    # unmasked lane-dense vst and VMEM blocks stay bounded.  Padding costs one
    # extra HBM pass and only triggers for awkward L.
    L_pad = ((L + 127) // 128) * 128
    x_in = x if L_pad == L else jnp.pad(x, ((0, 0), (0, 0), (0, L_pad - L)))

    bt, tl = _pick_tiles(N, L_pad, C, max_tl, target_block_bytes, min_steps)
    grid = (N // bt, L_pad // tl)

    slab_spec = pl.BlockSpec((bt, C, tl), lambda n, l: (n, 0, l))
    w_spec = pl.BlockSpec((C, C), lambda n, l: (0, 0))
    shift_spec = pl.BlockSpec((C, 2), lambda n, l: (0, 0))

    # Scoped-VMEM sizing: double-buffered in + out slabs, resident bf16
    # weights + shifts, per-row f32 temporaries; 2x headroom, capped below
    # v7x's 64 MiB physical VMEM.
    block_bytes = bt * C * tl * 4
    vmem_needed = 4 * block_bytes + 2 * C * C * 2 + C * 2 * 4 + 4 * C * tl * 4
    vmem_limit = int(min(48 * 1024 * 1024,
                         max(24 * 1024 * 1024, 2 * vmem_needed)))

    cost = pl.CostEstimate(
        flops=4 * N * L_pad * C * C,                 # two (C,C)@(C,L) matmuls
        transcendentals=0,
        bytes_accessed=2 * N * C * L_pad * 4 + 2 * C * C * 2 + C * 2 * 4,
    )

    kernel = functools.partial(_residual_block_kernel, bt=bt, unroll=min(bt, 8))

    out = pl.pallas_call(
        kernel,
        out_shape=jax.ShapeDtypeStruct((N, C, L_pad), x.dtype),
        grid_spec=pltpu.PrefetchScalarGridSpec(
            num_scalar_prefetch=0,
            grid=grid,
            in_specs=[slab_spec, w_spec, w_spec, shift_spec],
            out_specs=slab_spec,
        ),
        compiler_params=pltpu.CompilerParams(
            dimension_semantics=("parallel", "parallel"),
            vmem_limit_bytes=vmem_limit),
        cost_estimate=cost,
    )(x_in, w1s, w2s, shifts)

    return out if L_pad == L else out[:, :, :L]


def init_params(key, linear_size):
    """Deterministic parameters matching the PyTorch module's shapes."""
    C = linear_size
    ks = jax.random.split(key, 12)
    bound = 1.0 / jnp.sqrt(C)  # PyTorch Conv1d default init range
    w1 = jax.random.uniform(ks[0], (C, C, 1), jnp.float32, -bound, bound)
    b1 = jax.random.uniform(ks[1], (C,), jnp.float32, -bound, bound)
    w2 = jax.random.uniform(ks[2], (C, C, 1), jnp.float32, -bound, bound)
    b2 = jax.random.uniform(ks[3], (C,), jnp.float32, -bound, bound)
    # Non-trivial BN running stats to actually exercise the scale/shift fold.
    gamma1 = jax.random.uniform(ks[4], (C,), jnp.float32, 0.5, 1.5)
    beta1 = 0.1 * jax.random.normal(ks[5], (C,), jnp.float32)
    mean1 = 0.1 * jax.random.normal(ks[6], (C,), jnp.float32)
    var1 = jax.random.uniform(ks[7], (C,), jnp.float32, 0.5, 1.5)
    gamma2 = jax.random.uniform(ks[8], (C,), jnp.float32, 0.5, 1.5)
    beta2 = 0.1 * jax.random.normal(ks[9], (C,), jnp.float32)
    mean2 = 0.1 * jax.random.normal(ks[10], (C,), jnp.float32)
    var2 = jax.random.uniform(ks[11], (C,), jnp.float32, 0.5, 1.5)
    return (w1, b1, gamma1, beta1, mean1, var1,
            w2, b2, gamma2, beta2, mean2, var2)


def reference_forward(x, params):
    """Pure-JAX f32 reference (inference mode) mirroring the PyTorch module."""
    w1, b1, g1, be1, m1, v1, w2, b2, g2, be2, m2, v2 = params
    C = x.shape[1]

    def conv1(x, w, b):  # x (N,C,L), w (O,C,1)
        return jnp.einsum('ncl,oc->nol', x, w.reshape(C, C)) + b[None, :, None]

    def bn(x, g, be, m, v, eps=1e-5):
        return (x - m[None, :, None]) / jnp.sqrt(v[None, :, None] + eps) \
            * g[None, :, None] + be[None, :, None]

    def lrelu(x):
        return jnp.where(x > 0, x, 0.2 * x)

    y = lrelu(bn(conv1(x, w1, b1), g1, be1, m1, v1))
    y = lrelu(bn(conv1(y, w2, b2), g2, be2, m2, v2))
    return x + y


def _check(out, ref):
    assert out.shape == ref.shape
    err = float(jnp.max(jnp.abs(out - ref)))
    # bf16 matmul operands (f32 accumulate) => ~1e-3..1e-2 abs error budget
    # vs the pure-f32 reference; elementwise math is exact f32.
    assert jnp.allclose(out, ref, atol=3e-2, rtol=3e-2), err


if __name__ == "__main__":
    key = jax.random.PRNGKey(0)
    k_x, k_p, k_x2, k_x3 = jax.random.split(key, 4)

    linear_size = 32   # channels (l_size)

    # --- test 1: production-default knobs; small shape -> Bt=1, tl=128, 8 steps.
    N, L = 2, 512
    x = jax.random.normal(k_x, (N, linear_size, L), jnp.float32)
    params = init_params(k_p, linear_size)
    out = jax.block_until_ready(linear_block_forward(x, params))
    _check(out, reference_forward(x, params))

    # --- test 2: exercises the batch-tiled fori_loop path (Bt=2, fully unrolled).
    N2, L2 = 8, 384
    x2 = jax.random.normal(k_x2, (N2, linear_size, L2), jnp.float32)
    out2 = jax.block_until_ready(linear_block_forward(x2, params, min_steps=4))
    _check(out2, reference_forward(x2, params))

    # --- test 3: awkward L (padded to 256) + large batch tile (Bt=16, unroll=8).
    N3, L3 = 16, 200
    x3 = jax.random.normal(k_x3, (N3, linear_size, L3), jnp.float32)
    out3 = jax.block_until_ready(linear_block_forward(x3, params, min_steps=1))
    _check(out3, reference_forward(x3, params))

    print("KERNEL_OK")
</pallas_src>

<mosaic_0001>
module attributes {stable_mosaic.version = 11 : i64} {
  func.func @_residual_block_kernel(%arg0: i32, %arg1: i32, %arg2: memref<1x32x128xf32, #tpu.memory_space<vmem>>, %arg3: memref<32x32xbf16, #tpu.memory_space<vmem>>, %arg4: memref<32x32xbf16, #tpu.memory_space<vmem>>, %arg5: memref<32x2xf32, #tpu.memory_space<vmem>>, %arg6: memref<1x32x128xf32, #tpu.memory_space<vmem>>) attributes {dimension_semantics = [#tpu.dimension_semantics<parallel>, #tpu.dimension_semantics<parallel>], iteration_bounds = array<i64: 2, 4>, scalar_prefetch = 0 : i64, scratch_operands = 0 : i64, tpu.core_type = #tpu.core_type<tc>, window_params = [{transform_indices = @transform_0, window_bounds = array<i64: 1, 32, 128>}, {pipeline_mode = #tpu.pipeline_mode<synchronous>, transform_indices = @transform_1, window_bounds = array<i64: 32, 32>}, {pipeline_mode = #tpu.pipeline_mode<synchronous>, transform_indices = @transform_2, window_bounds = array<i64: 32, 32>}, {pipeline_mode = #tpu.pipeline_mode<synchronous>, transform_indices = @transform_3, window_bounds = array<i64: 32, 2>}, {transform_indices = @transform_4, window_bounds = array<i64: 1, 32, 128>}]} {
    %c0 = arith.constant 0 : index
    %c0_0 = arith.constant 0 : index
    %0 = vector.load %arg5[%c0, %c0_0] : memref<32x2xf32, #tpu.memory_space<vmem>>, vector<32x1xf32>
    %c0_1 = arith.constant 0 : index
    %c1 = arith.constant 1 : index
    %1 = vector.load %arg5[%c0_1, %c1] : memref<32x2xf32, #tpu.memory_space<vmem>>, vector<32x1xf32>
    %c0_2 = arith.constant 0 : index
    %c0_3 = arith.constant 0 : index
    %2 = vector.load %arg3[%c0_2, %c0_3] : memref<32x32xbf16, #tpu.memory_space<vmem>>, vector<32x32xbf16>
    %c0_4 = arith.constant 0 : index
    %c0_5 = arith.constant 0 : index
    %3 = vector.load %arg4[%c0_4, %c0_5] : memref<32x32xbf16, #tpu.memory_space<vmem>>, vector<32x32xbf16>
    %c0_6 = arith.constant 0 : index
    %c0_7 = arith.constant 0 : index
    %c0_8 = arith.constant 0 : index
    %4 = vector.load %arg2[%c0_6, %c0_7, %c0_8] : memref<1x32x128xf32, #tpu.memory_space<vmem>>, vector<1x32x128xf32>
    %5 = vector.shape_cast %4 : vector<1x32x128xf32> to vector<32x128xf32>
    %6 = arith.truncf %5 : vector<32x128xf32> to vector<32x128xbf16>
    %cst = arith.constant dense<0.000000e+00> : vector<32x128xf32>
    %7 = tpu.matmul %2, %6, %cst {dimension_numbers = #tpu.dot_dimension_numbers<[1], [0], [0], [1], [0, 0, 1, 1], [], []>} : vector<32x32xbf16>, vector<32x128xbf16>, vector<32x128xf32> -> vector<32x128xf32>
    %8 = vector.broadcast %0 : vector<32x1xf32> to vector<32x128xf32>
    %9 = arith.addf %7, %8 : vector<32x128xf32>
    %cst_9 = arith.constant 0.000000e+00 : f32
    %10 = vector.broadcast %cst_9 : f32 to vector<32x128xf32>
    %11 = arith.cmpf ogt, %9, %10 : vector<32x128xf32>
    %cst_10 = arith.constant 2.000000e-01 : f32
    %12 = vector.broadcast %cst_10 : f32 to vector<32x128xf32>
    %13 = arith.mulf %12, %9 : vector<32x128xf32>
    %14 = arith.select %11, %9, %13 : vector<32x128xi1>, vector<32x128xf32>
    %15 = arith.truncf %14 : vector<32x128xf32> to vector<32x128xbf16>
    %cst_11 = arith.constant dense<0.000000e+00> : vector<32x128xf32>
    %16 = tpu.matmul %3, %15, %cst_11 {dimension_numbers = #tpu.dot_dimension_numbers<[1], [0], [0], [1], [0, 0, 1, 1], [], []>} : vector<32x32xbf16>, vector<32x128xbf16>, vector<32x128xf32> -> vector<32x128xf32>
    %17 = vector.broadcast %1 : vector<32x1xf32> to vector<32x128xf32>
    %18 = arith.addf %16, %17 : vector<32x128xf32>
    %cst_12 = arith.constant 0.000000e+00 : f32
    %19 = vector.broadcast %cst_12 : f32 to vector<32x128xf32>
    %20 = arith.cmpf ogt, %18, %19 : vector<32x128xf32>
    %cst_13 = arith.constant 2.000000e-01 : f32
    %21 = vector.broadcast %cst_13 : f32 to vector<32x128xf32>
    %22 = arith.mulf %21, %18 : vector<32x128xf32>
    %23 = arith.select %20, %18, %22 : vector<32x128xi1>, vector<32x128xf32>
    %c0_14 = arith.constant 0 : index
    %c0_15 = arith.constant 0 : index
    %c0_16 = arith.constant 0 : index
    %24 = vector.load %arg2[%c0_14, %c0_15, %c0_16] : memref<1x32x128xf32, #tpu.memory_space<vmem>>, vector<1x32x128xf32>
    %25 = vector.shape_cast %24 : vector<1x32x128xf32> to vector<32x128xf32>
    %26 = arith.addf %25, %23 : vector<32x128xf32>
    %c0_17 = arith.constant 0 : index
    %c0_18 = arith.constant 0 : index
    %c0_19 = arith.constant 0 : index
    %27 = vector.load %arg6[%c0_17, %c0_18, %c0_19] : memref<1x32x128xf32, #tpu.memory_space<vmem>>, vector<1x32x128xf32>
    %28 = vector.shape_cast %27 : vector<1x32x128xf32> to vector<32x128xf32>
    %29 = vector.shape_cast %26 : vector<32x128xf32> to vector<1x32x128xf32>
    tpu.vector_store %arg6[%c0_17, %c0_18, %c0_19], %29 {strides = array<i32>} : memref<1x32x128xf32, #tpu.memory_space<vmem>>, vector<1x32x128xf32>,
    return
  }
  func.func @transform_0(%arg0: i32, %arg1: i32) -> (i32, i32, i32) {
    %c0_i32 = arith.constant 0 : i32
    %c0_i32_0 = arith.constant 0 : i32
    return %arg0, %c0_i32, %arg1 : i32, i32, i32
  }
  func.func @transform_1(%arg0: i32, %arg1: i32) -> (i32, i32) {
    %c0_i32 = arith.constant 0 : i32
    %c0_i32_0 = arith.constant 0 : i32
    %c0_i32_1 = arith.constant 0 : i32
    return %c0_i32, %c0_i32_0 : i32, i32
  }
  func.func @transform_2(%arg0: i32, %arg1: i32) -> (i32, i32) {
    %c0_i32 = arith.constant 0 : i32
    %c0_i32_0 = arith.constant 0 : i32
    %c0_i32_1 = arith.constant 0 : i32
    return %c0_i32, %c0_i32_0 : i32, i32
  }
  func.func @transform_3(%arg0: i32, %arg1: i32) -> (i32, i32) {
    %c0_i32 = arith.constant 0 : i32
    %c0_i32_0 = arith.constant 0 : i32
    %c0_i32_1 = arith.constant 0 : i32
    return %c0_i32, %c0_i32_0 : i32, i32
  }
  func.func @transform_4(%arg0: i32, %arg1: i32) -> (i32, i32, i32) {
    %c0_i32 = arith.constant 0 : i32
    %c0_i32_0 = arith.constant 0 : i32
    return %arg0, %c0_i32, %arg1 : i32, i32, i32
  }
}

</mosaic_0001>

<llo_original>
// kernel: linear_block_forward.1
$region0: #{linear_block_forward.1}
  #allocation0 [shape = 'u32[]', space=smem, size = 0x4, offset = 0x4, fixed_abs, tag = 'smem constant byte address 0x4 - core index']
  #allocation1 [shape = 'u32[144,128]{1,0:T(1,128)}', space=vmem, size = 0x12000, scoped, tag = 'internal scratch']
  %s0 = inlined_call_operand.hbm [shape: f32[2,32,512], index: 0, kind: input, shape index: {}]
  %s1 = inlined_call_operand.vmem [shape: bf16[32,32], index: 1, kind: input, shape index: {}]
  %s2 = inlined_call_operand.vmem [shape: bf16[32,32], index: 2, kind: input, shape index: {}]
  %s3 = inlined_call_operand.vmem [shape: f32[32,2], index: 3, kind: input, shape index: {}]
  %s4 = inlined_call_operand.hbm [shape: f32[2,32,512], index: 4, kind: output, shape index: {}]
  %s5 = sld [smem:[#allocation0]]
  $region53: #{linear_block_forward.1} parent=0
    _
  %s7 = ssub.s32 1, %s5
  %s8 = scalar_select 0, %s7, %s5
  $region1: #{linear_block_forward.1} parent=0
    #allocation2 [shape = 'u8[32768]{0}', space=vmem, size = 0x8000, scoped, tag = 'input window, operand 0']
    #allocation3 [shape = 's32[2]{0}', space=sflag, size = 0x8, scoped, tag = 'scoped memory for linear_block_forward.1']
    #allocation4 [shape = 's32[2]{0}', space=sflag, size = 0x8, scoped, tag = 'scoped memory for linear_block_forward.1']
    #allocation5 [shape = 'u8[32768]{0}', space=vmem, size = 0x8000, scoped, tag = 'output window, operand 0']
    %9 = vsyncpa [#allocation3], 0
    %s10 = scalar_lea.sflag [#allocation3], 1
    %11 = vsyncpa %s10, 0
    %12 = vsyncpa [#allocation4], 0
    %s13 = scalar_lea.sflag [#allocation4], 1
    %14 = vsyncpa %s13, 0
    loop: start=0, step=1, limit=10
    $region2: #{linear_block_forward.1} parent=1 // loop_pre_header
      _
    $region3: #{linear_block_forward.1} parent=1 // loop_header
      %s16 = sphi 0, %s20
      %p17 = scmp.ge.s32.totalorder %s16, 10
      %s23 = sphi 0, %s35
      %s24 = sphi 0, %s31
      %s25 = sphi 0, %s23
      %s26 = sphi 0, %s24
      %s27 = sphi 0, %s25
      %s28 = sphi 0, %s26
      %s40 = sphi 0, %s42
      %s43 = sphi 0, %s40
      %s44 = sphi 0, %s43
      %s60 = sphi 0, %s44
      %s64 = sphi 0, %s64
      %s66 = sphi 0, %s64
      %s67 = sphi 0, %s66
      %s81 = sphi 0, %s67
      %s85 = sphi 0, %s85
      %s87 = sphi 0, %s85
      %s88 = sphi 0, %s87
      %s102 = sphi 0, %s88
      %s106 = sphi 0, %s106
      %s108 = sphi 0, %s106
      %s109 = sphi 0, %s108
      %s123 = sphi 0, %s109
      %s131 = sphi 0, %s133
      %s134 = sphi 0, %s131
      %s135 = sphi 0, %s134
      %s151 = sphi 0, %s135
    $region4: #{linear_block_forward.1} parent=1 // loop_header_branch
      %19 = sbr.rel (%p17) target = $region8
    $region5: #{linear_block_forward.1} parent=1 // loop_body
      %s21 = ssub.s32 %s16, 1
      %s22 = ssub.s32 %s16, 2
      %s29 = sadd.s32 1, %s24
      %p30 = scmp.ge.s32.totalorder %s29, 4
      %s31 = scalar_select %p30, 0, %s29
      %s32 = sadd.s32 1, %s23
      %s33 = scalar_select %p30, %s32, %s23
      %p34 = scmp.ge.s32.totalorder %s33, 2
      %s35 = scalar_select %p34, 0, %s33
      %s36 = ssub.s32 %s23, %s35
      %s37 = ssub.s32 %s24, %s31
      %s38 = sor.u32 %s36, %s37
      %p39 = scmp.eq.s32.totalorder %s38, 0
      %s41 = sadd.s32 %s40, 1
      %s42 = scalar_select %p39, %s40, %s41
      %p45 = pneg %p39
      %p46 = scmp.eq.s32.totalorder %s16, 7
      %p47 = por %p45, %p46
      %p48 = scmp.ne.s32.totalorder %s40, %s43
      %p49 = scmp.eq.s32.totalorder %s16, 0
      %p50 = por %p48, %p49
      %p51 = scmp.ne.s32.totalorder %s40, %s43
      %p52 = scmp.eq.s32.totalorder %s21, 7
      %p53 = por %p51, %p52
      %p54 = scmp.ne.s32.totalorder %s43, %s44
      %p55 = scmp.eq.s32.totalorder %s21, 0
      %p56 = por %p54, %p55
      %p57 = scmp.ne.s32.totalorder %s43, %s44
      %p58 = scmp.eq.s32.totalorder %s22, 7
      %p59 = por %p57, %p58
      %p61 = scmp.ne.s32.totalorder %s44, %s60
      %p62 = scmp.eq.s32.totalorder %s22, 0
      %p63 = por %p61, %p62
      %s65 = sadd.s32 %s64, 1
      %p68 = scmp.eq.s32.totalorder %s16, 7
      %p69 = scmp.ne.s32.totalorder %s64, %s66
      %p70 = scmp.eq.s32.totalorder %s16, 0
      %p71 = por %p69, %p70
      %p72 = scmp.ne.s32.totalorder %s64, %s66
      %p73 = scmp.eq.s32.totalorder %s21, 7
      %p74 = por %p72, %p73
      %p75 = scmp.ne.s32.totalorder %s66, %s67
      %p76 = scmp.eq.s32.totalorder %s21, 0
      %p77 = por %p75, %p76
      %p78 = scmp.ne.s32.totalorder %s66, %s67
      %p79 = scmp.eq.s32.totalorder %s22, 7
      %p80 = por %p78, %p79
      %p82 = scmp.ne.s32.totalorder %s67, %s81
      %p83 = scmp.eq.s32.totalorder %s22, 0
      %p84 = por %p82, %p83
      %s86 = sadd.s32 %s85, 1
      %p89 = scmp.eq.s32.totalorder %s16, 7
      %p90 = scmp.ne.s32.totalorder %s85, %s87
      %p91 = scmp.eq.s32.totalorder %s16, 0
      %p92 = por %p90, %p91
      %p93 = scmp.ne.s32.totalorder %s85, %s87
      %p94 = scmp.eq.s32.totalorder %s21, 7
      %p95 = por %p93, %p94
      %p96 = scmp.ne.s32.totalorder %s87, %s88
      %p97 = scmp.eq.s32.totalorder %s21, 0
      %p98 = por %p96, %p97
      %p99 = scmp.ne.s32.totalorder %s87, %s88
      %p100 = scmp.eq.s32.totalorder %s22, 7
      %p101 = por %p99, %p100
      %p103 = scmp.ne.s32.totalorder %s88, %s102
      %p104 = scmp.eq.s32.totalorder %s22, 0
      %p105 = por %p103, %p104
      %s107 = sadd.s32 %s106, 1
      %p110 = scmp.eq.s32.totalorder %s16, 7
      %p111 = scmp.ne.s32.totalorder %s106, %s108
      %p112 = scmp.eq.s32.totalorder %s16, 0
      %p113 = por %p111, %p112
      %p114 = scmp.ne.s32.totalorder %s106, %s108
      %p115 = scmp.eq.s32.totalorder %s21, 7
      %p116 = por %p114, %p115
      %p117 = scmp.ne.s32.totalorder %s108, %s109
      %p118 = scmp.eq.s32.totalorder %s21, 0
      %p119 = por %p117, %p118
      %p120 = scmp.ne.s32.totalorder %s108, %s109
      %p121 = scmp.eq.s32.totalorder %s22, 7
      %p122 = por %p120, %p121
      %p124 = scmp.ne.s32.totalorder %s109, %s123
      %p125 = scmp.eq.s32.totalorder %s22, 0
      %p126 = por %p124, %p125
      %s127 = ssub.s32 %s23, %s35
      %s128 = ssub.s32 %s24, %s31
      %s129 = sor.u32 %s127, %s128
      %p130 = scmp.eq.s32.totalorder %s129, 0
      %s132 = sadd.s32 %s131, 1
      %s133 = scalar_select %p130, %s131, %s132
      %p136 = pneg %p130
      %p137 = scmp.eq.s32.totalorder %s16, 7
      %p138 = por %p136, %p137
      %p139 = scmp.ne.s32.totalorder %s131, %s134
      %p140 = scmp.eq.s32.totalorder %s16, 0
      %p141 = por %p139, %p140
      %p142 = scmp.ne.s32.totalorder %s131, %s134
      %p143 = scmp.eq.s32.totalorder %s21, 7
      %p144 = por %p142, %p143
      %p145 = scmp.ne.s32.totalorder %s134, %s135
      %p146 = scmp.eq.s32.totalorder %s21, 0
      %p147 = por %p145, %p146
      %p148 = scmp.ne.s32.totalorder %s134, %s135
      %p149 = scmp.eq.s32.totalorder %s22, 7
      %p150 = por %p148, %p149
      %p152 = scmp.ne.s32.totalorder %s135, %s151
      %p153 = scmp.eq.s32.totalorder %s22, 0
      %p154 = por %p152, %p153
      %p155 = scmp.le.s32.totalorder 1, %s16
      %p156 = scmp.lt.s32.totalorder %s16, 9
      %p157 = pnand %p155, %p156
      %p158 = pneg %p157
      // Predicated region
      $region9: #{linear_block_forward.1} parent=5 // pred_check
        _
      $region10: #{linear_block_forward.1} parent=5 // pred_check_branch
        %160 = sbr.rel (%p157) target = $region12
      $region11: #{linear_block_forward.1} parent=5 // pred_region
        %s161 = ssub.s32 %s16, 1
        // Predicated region
        $region13: #{linear_block_forward.1} parent=11 // pred_check
          %p162 = pneg %p77
        $region14: #{linear_block_forward.1} parent=11 // pred_check_branch
          %164 = sbr.rel (%p162) target = $region16
        $region15: #{linear_block_forward.1} parent=11 // pred_region
          _
        $region16: #{linear_block_forward.1} parent=11 // pred_fallthru
          _
        // Predicated region
        $region17: #{linear_block_forward.1} parent=11 // pred_check
          %p165 = pneg %p98
        $region18: #{linear_block_forward.1} parent=11 // pred_check_branch
          %167 = sbr.rel (%p165) target = $region20
        $region19: #{linear_block_forward.1} parent=11 // pred_region
          _
        $region20: #{linear_block_forward.1} parent=11 // pred_fallthru
          _
        // Predicated region
        $region21: #{linear_block_forward.1} parent=11 // pred_check
          %p168 = pneg %p119
        $region22: #{linear_block_forward.1} parent=11 // pred_check_branch
          %170 = sbr.rel (%p168) target = $region24
        $region23: #{linear_block_forward.1} parent=11 // pred_region
          _
        $region24: #{linear_block_forward.1} parent=11 // pred_fallthru
          _
      $region12: #{linear_block_forward.1} parent=5 // pred_fallthru
        _
      %p171 = scmp.lt.s32.totalorder %s16, 8
      // Predicated region
      $region25: #{linear_block_forward.1} parent=5 // pred_check
        %p172 = pneg %p171
      $region26: #{linear_block_forward.1} parent=5 // pred_check_branch
        %174 = sbr.rel (%p172) target = $region28
      $region27: #{linear_block_forward.1} parent=5 // pred_region
        // Predicated region
        $region29: #{linear_block_forward.1} parent=27 // pred_check
          %p175 = pneg %p50
        $region30: #{linear_block_forward.1} parent=27 // pred_check_branch
          %177 = sbr.rel (%p175) target = $region32
        $region31: #{linear_block_forward.1} parent=27 // pred_region
          %s178 = sand.u32 %s40, 1
          %s179 = scalar_lea.sflag [#allocation3], %s178
          %s180 = sand.u32 %s40, 1
          %s181 = smul.addr %s180, 32
          %s182 = scalar_lea.vmem [#allocation2], %s181
          %s184 = ssub.s32 512, 512
          %185 = vsyncadd %s179, %s184
          %s186 = smul.addr %s23, 16
          %s187 = sadd.s32 %s24, %s186
          %s188 = smul.addr %s187, 128
          %s189 = scalar_lea.hbm %s0, %s188
          %s190 = sshll.u32 %s182, 4
          %s191 = int_to_ptr.vmem [resolvable:$true] %s190
          %196 = dma.hbm_to_vmem [thread:$0]  %s189, 512, %s191, %s179, 512, 128, 8
        $region32: #{linear_block_forward.1} parent=27 // pred_fallthru
          _
      $region28: #{linear_block_forward.1} parent=5 // pred_fallthru
        _
      %p197 = scmp.le.s32.totalorder 1, %s16
      %p198 = scmp.lt.s32.totalorder %s16, 9
      %p199 = pnand %p197, %p198
      %p200 = pneg %p199
      // Predicated region
      $region33: #{linear_block_forward.1} parent=5 // pred_check
        _
      $region34: #{linear_block_forward.1} parent=5 // pred_check_branch
        %202 = sbr.rel (%p199) target = $region36
      $region35: #{linear_block_forward.1} parent=5 // pred_region
        %s203 = ssub.s32 %s16, 1
        %s204 = sand.u32 %s43, 1
        %s205 = scalar_lea.sflag [#allocation3], %s204
        %s206 = sand.u32 %s43, 1
        %s207 = smul.addr %s206, 32
        %s208 = scalar_lea.vmem [#allocation2], %s207
        // Predicated region
        $region37: #{linear_block_forward.1} parent=35 // pred_check
          %p209 = pneg %p56
        $region38: #{linear_block_forward.1} parent=35 // pred_check_branch
          %211 = sbr.rel (%p209) target = $region40
        $region39: #{linear_block_forward.1} parent=35 // pred_region
          %212 = dma.done %s205, 512
        $region40: #{linear_block_forward.1} parent=35 // pred_fallthru
          _
        %s213 = sand.u32 %s43, 1
        %s214 = scalar_lea.sflag [#allocation3], %s213
        %s215 = sand.u32 %s43, 1
        %s216 = smul.addr %s215, 32
        %s217 = scalar_lea.vmem [#allocation2], %s216
        %p218 = pneg %p56
        %p219 = pneg %p53
        %p220 = pneg %p77
        %p221 = pneg %p74
        %p222 = pneg %p98
        %p223 = pneg %p95
        %p224 = pneg %p119
        %p225 = pneg %p116
        %p226 = pneg %p147
        %p227 = pneg %p144
        %s228 = sand.u32 %s134, 1
        %s229 = scalar_lea.sflag [#allocation4], %s228
        %s230 = sand.u32 %s134, 1
        %s231 = smul.addr %s230, 32
        %s232 = scalar_lea.vmem [#allocation5], %s231
        %v234 = vld [vmem:[%s3] sm:$0xff]
        %v235 = vld [vmem:[%s3 + $0x8] sm:$0xff]
        %v236 = vld [vmem:[%s3 + $0x10] sm:$0xff]
        %v237 = vld [vmem:[%s3 + $0x18] sm:$0xff]
        %v238 = vld [vmem:[%s1] sm:$0xf]
        %v239 = vld [vmem:[%s1 + $0x4] sm:$0xf]
        %v240 = vld [vmem:[%s1 + $0x8] sm:$0xf]
        %v241 = vld [vmem:[%s1 + $0xc] sm:$0xf]
        %v242 = vld [vmem:[%s2] sm:$0xf]
        %v243 = vld [vmem:[%s2 + $0x4] sm:$0xf]
        %v244 = vld [vmem:[%s2 + $0x8] sm:$0xf]
        %v245 = vld [vmem:[%s2 + $0xc] sm:$0xf]
        %v246 = vld [vmem:[%s208] sm:$0xff]
        %v247 = vld [vmem:[%s208 + $0x8] sm:$0xff]
        %v248 = vld [vmem:[%s208 + $0x10] sm:$0xff]
        %v249 = vld [vmem:[%s208 + $0x18] sm:$0xff]
        %v250 = vpack.c.bf16 %v247, %v246
        %v251 = vpack.c.bf16 %v249, %v248
        %253 = vset.pattern.permute.xlu0 0
        %254 = vperm.xlu0 %253, %v234
        %v255 = vpop.permute.xlu0 %254
        %258 = vset.pattern.permute.xlu0 0
        %259 = vperm.xlu0 %258, %v235
        %v260 = vpop.permute.xlu0 %259
        %263 = vset.pattern.permute.xlu0 0
        %264 = vperm.xlu0 %263, %v236
        %v265 = vpop.permute.xlu0 %264
        %268 = vset.pattern.permute.xlu0 0
        %269 = vperm.xlu0 %268, %v237
        %v270 = vpop.permute.xlu0 %269
        %v276 = vunpack.c.l.b16 %v238
        %v277 = vunpack.c.l.b16 %v239
        %v278 = vunpack.c.l.b16 %v240
        %v279 = vunpack.c.l.b16 %v241
        %v280 = vpack.c.b16 %v277, %v276
        %v281 = vpack.c.b16 %v279, %v278
        %vm282 = vcmask 261120
        %v284 = vsel %vm282, %v280, 0
        %v287 = vsel %vm282, %v281, 0
        %289 = vmatprep.subr.bf16.mxu0 0
        %290 = vmatpush1.bf16.msra.mxu0 %v250
        %291 = vmatprep.subr.bf16.mxu0 0
        %292 = vmatpush1.bf16.msra.mxu0 %v251
        %293 = vmatprep.subr.bf16.mxu0 0
        %294 = vmatpush1.bf16.msra.mxu0 0
        %295 = vmatprep.subr.bf16.mxu0 0
        %296 = vmatpush1.bf16.msra.mxu0 0
        %297 = vmatprep.subr.bf16.mxu0 0
        %298 = vmatpush1.bf16.msra.mxu0 0
        %299 = vmatprep.subr.bf16.mxu0 0
        %300 = vmatpush1.bf16.msra.mxu0 0
        %301 = vmatprep.subr.bf16.mxu0 0
        %302 = vmatpush1.bf16.msra.mxu0 0
        %303 = vmatprep.subr.bf16.mxu0 0
        %304 = vmatpush1.bf16.msra.mxu0 0
        %305 = vmatprep.subr.bf16.mxu0 0
        %306 = vmatpush1.bf16.msra.mxu0 0
        %307 = vmatprep.subr.bf16.mxu0 0
        %308 = vmatpush1.bf16.msra.mxu0 0
        %309 = vmatprep.subr.bf16.mxu0 0
        %310 = vmatpush1.bf16.msra.mxu0 0
        %311 = vmatprep.subr.bf16.mxu0 0
        %312 = vmatpush1.bf16.msra.mxu0 0
        %313 = vmatprep.subr.bf16.mxu0 0
        %314 = vmatpush1.bf16.msra.mxu0 0
        %315 = vmatprep.subr.bf16.mxu0 0
        %316 = vmatpush1.bf16.msra.mxu0 0
        %317 = vmatprep.subr.bf16.mxu0 0
        %318 = vmatpush1.bf16.msra.mxu0 0
        %319 = vmatprep.subr.bf16.mxu0 0
        %320 = vmatpush1.bf16.msra.mxu0 0
        %321 = vmatprep.mubr.bf16.mxu0 0
        %322 = vmatmul.mubr.bf16.gmra.mrb[0].mxu0 %v284
        %v323 = vpop.f32.mrb[0].mxu0
        %v324 = vadd.f32 %v255, %v323
        %v325 = vpop.f32.mrb[0].mxu0
        %v326 = vpop.f32.mrb[0].mxu0
        %v327 = vadd.f32 %v260, %v326
        %v328 = vpop.f32.mrb[0].mxu0
        %329 = vmatprep.mubr.bf16.mxu0 0
        %330 = vmatmul.mubr.bf16.gmra.mrb[0].mxu0 %v287
        %v331 = vpop.f32.mrb[0].mxu0
        %v332 = vadd.f32 %v265, %v331
        %v333 = vpop.f32.mrb[0].mxu0
        %v334 = vpop.f32.mrb[0].mxu0
        %v335 = vadd.f32 %v270, %v334
        %v336 = vpop.f32.mrb[0].mxu0
        %337 = vdwg.mxu0
        %vm338 = vcmp.gt.f32.partialorder %v324, 0.0
        %vm339 = vcmp.gt.f32.partialorder %v327, 0.0
        %vm340 = vcmp.gt.f32.partialorder %v332, 0.0
        %vm341 = vcmp.gt.f32.partialorder %v335, 0.0
        %v342 = vmul.f32 %v324, 0.2
        %v343 = vmul.f32 %v327, 0.2
        %v344 = vmul.f32 %v332, 0.2
        %v345 = vmul.f32 %v335, 0.2
        %v346 = vsel %vm338, %v324, %v342
        %v347 = vsel %vm339, %v327, %v343
        %v348 = vsel %vm340, %v332, %v344
        %v349 = vsel %vm341, %v335, %v345
        %v350 = vpack.c.bf16 %v347, %v346
        %v351 = vpack.c.bf16 %v349, %v348
        %352 = vset.pattern.permute.xlu0 1
        %353 = vperm.xlu0 %352, %v234
        %v354 = vpop.permute.xlu0 %353
        %356 = vset.pattern.permute.xlu0 1
        %357 = vperm.xlu0 %356, %v235
        %v358 = vpop.permute.xlu0 %357
        %360 = vset.pattern.permute.xlu0 1
        %361 = vperm.xlu0 %360, %v236
        %v362 = vpop.permute.xlu0 %361
        %364 = vset.pattern.permute.xlu0 1
        %365 = vperm.xlu0 %364, %v237
        %v366 = vpop.permute.xlu0 %365
        %v372 = vunpack.c.l.b16 %v242
        %v373 = vunpack.c.l.b16 %v243
        %v374 = vunpack.c.l.b16 %v244
        %v375 = vunpack.c.l.b16 %v245
        %v376 = vpack.c.b16 %v373, %v372
        %v377 = vpack.c.b16 %v375, %v374
        %v379 = vsel %vm282, %v376, 0
        %v382 = vsel %vm282, %v377, 0
        %384 = vmatprep.subr.bf16.mxu0 0
        %385 = vmatpush1.bf16.msra.mxu0 %v350
        %386 = vmatprep.subr.bf16.mxu0 0
        %387 = vmatpush1.bf16.msra.mxu0 %v351
        %388 = vmatprep.subr.bf16.mxu0 0
        %389 = vmatpush1.bf16.msra.mxu0 0
        %390 = vmatprep.subr.bf16.mxu0 0
        %391 = vmatpush1.bf16.msra.mxu0 0
        %392 = vmatprep.subr.bf16.mxu0 0
        %393 = vmatpush1.bf16.msra.mxu0 0
        %394 = vmatprep.subr.bf16.mxu0 0
        %395 = vmatpush1.bf16.msra.mxu0 0
        %396 = vmatprep.subr.bf16.mxu0 0
        %397 = vmatpush1.bf16.msra.mxu0 0
        %398 = vmatprep.subr.bf16.mxu0 0
        %399 = vmatpush1.bf16.msra.mxu0 0
        %400 = vmatprep.subr.bf16.mxu0 0
        %401 = vmatpush1.bf16.msra.mxu0 0
        %402 = vmatprep.subr.bf16.mxu0 0
        %403 = vmatpush1.bf16.msra.mxu0 0
        %404 = vmatprep.subr.bf16.mxu0 0
        %405 = vmatpush1.bf16.msra.mxu0 0
        %406 = vmatprep.subr.bf16.mxu0 0
        %407 = vmatpush1.bf16.msra.mxu0 0
        %408 = vmatprep.subr.bf16.mxu0 0
        %409 = vmatpush1.bf16.msra.mxu0 0
        %410 = vmatprep.subr.bf16.mxu0 0
        %411 = vmatpush1.bf16.msra.mxu0 0
        %412 = vmatprep.subr.bf16.mxu0 0
        %413 = vmatpush1.bf16.msra.mxu0 0
        %414 = vmatprep.subr.bf16.mxu0 0
        %415 = vmatpush1.bf16.msra.mxu0 0
        %416 = vmatprep.mubr.bf16.mxu0 0
        %417 = vmatmul.mubr.bf16.gmra.mrb[0].mxu0 %v379
        %v418 = vpop.f32.mrb[0].mxu0
        %v419 = vadd.f32 %v354, %v418
        %v420 = vpop.f32.mrb[0].mxu0
        %v421 = vpop.f32.mrb[0].mxu0
        %v422 = vadd.f32 %v358, %v421
        %v423 = vpop.f32.mrb[0].mxu0
        %424 = vmatprep.mubr.bf16.mxu0 0
        %425 = vmatmul.mubr.bf16.gmra.mrb[0].mxu0 %v382
        %v426 = vpop.f32.mrb[0].mxu0
        %v427 = vadd.f32 %v362, %v426
        %v428 = vpop.f32.mrb[0].mxu0
        %v429 = vpop.f32.mrb[0].mxu0
        %v430 = vadd.f32 %v366, %v429
        %v431 = vpop.f32.mrb[0].mxu0
        %432 = vdwg.mxu0
        %vm433 = vcmp.gt.f32.partialorder %v419, 0.0
        %vm434 = vcmp.gt.f32.partialorder %v422, 0.0
        %vm435 = vcmp.gt.f32.partialorder %v427, 0.0
        %vm436 = vcmp.gt.f32.partialorder %v430, 0.0
        %v437 = vmul.f32 %v419, 0.2
        %v438 = vmul.f32 %v422, 0.2
        %v439 = vmul.f32 %v427, 0.2
        %v440 = vmul.f32 %v430, 0.2
        %v441 = vsel %vm433, %v419, %v437
        %v442 = vsel %vm434, %v422, %v438
        %v443 = vsel %vm435, %v427, %v439
        %v444 = vsel %vm436, %v430, %v440
        %v445 = vadd.f32 %v246, %v441
        %v446 = vadd.f32 %v247, %v442
        %v447 = vadd.f32 %v248, %v443
        %v448 = vadd.f32 %v249, %v444
        %449 = vst [vmem:[%s232] sm:$0xff] %v445
        %450 = vst [vmem:[%s232 + $0x8] sm:$0xff] %v446
        %451 = vst [vmem:[%s232 + $0x10] sm:$0xff] %v447
        %452 = vst [vmem:[%s232 + $0x18] sm:$0xff] %v448
        %s453 = sand.u32 %s134, 1
        %s454 = scalar_lea.sflag [#allocation4], %s453
        %s455 = sand.u32 %s134, 1
        %s456 = smul.addr %s455, 32
        %s457 = scalar_lea.vmem [#allocation5], %s456
        // Predicated region
        $region41: #{linear_block_forward.1} parent=35 // pred_check
          %p458 = pneg %p144
        $region42: #{linear_block_forward.1} parent=35 // pred_check_branch
          %460 = sbr.rel (%p458) target = $region44
        $region43: #{linear_block_forward.1} parent=35 // pred_region
          %s462 = ssub.s32 512, 512
          %463 = vsyncadd %s454, %s462
          %s464 = smul.addr %s25, 16
          %s465 = sadd.s32 %s26, %s464
          %s466 = smul.addr %s465, 128
          %s467 = scalar_lea.hbm %s4, %s466
          %s468 = sshll.u32 %s457, 4
          %s469 = int_to_ptr.vmem [resolvable:$true] %s468
          %474 = dma.vmem_to_hbm [thread:$0]  %s469, 512, %s467, %s454, 128, 512, 8
        $region44: #{linear_block_forward.1} parent=35 // pred_fallthru
          _
      $region36: #{linear_block_forward.1} parent=5 // pred_fallthru
        _
      %p475 = scmp.le.s32.totalorder 2, %s16
      // Predicated region
      $region45: #{linear_block_forward.1} parent=5 // pred_check
        %p476 = pneg %p475
      $region46: #{linear_block_forward.1} parent=5 // pred_check_branch
        %478 = sbr.rel (%p476) target = $region48
      $region47: #{linear_block_forward.1} parent=5 // pred_region
        %s479 = ssub.s32 %s16, 2
        // Predicated region
        $region49: #{linear_block_forward.1} parent=47 // pred_check
          %p480 = pneg %p150
        $region50: #{linear_block_forward.1} parent=47 // pred_check_branch
          %482 = sbr.rel (%p480) target = $region52
        $region51: #{linear_block_forward.1} parent=47 // pred_region
          %s483 = sand.u32 %s135, 1
          %s484 = scalar_lea.sflag [#allocation4], %s483
          %s485 = sand.u32 %s135, 1
          %s486 = smul.addr %s485, 32
          %s487 = scalar_lea.vmem [#allocation5], %s486
          %488 = dma.done %s484, 512
        $region52: #{linear_block_forward.1} parent=47 // pred_fallthru
          _
      $region48: #{linear_block_forward.1} parent=5 // pred_fallthru
        _
    $region6: #{linear_block_forward.1} parent=1 // loop_footer
      %s20 = sadd.s32 1, %s16
    $region7: #{linear_block_forward.1} parent=1 // loop_footer_branch
      %15 = sbr.rel target = $region3
    $region8: #{linear_block_forward.1} parent=1 // loop_exit
      _
    %489 = vsyncpa [#allocation3], 1
    %s490 = scalar_lea.sflag [#allocation3], 1
    %491 = vsyncpa %s490, 1
    %492 = vsyncpa [#allocation4], 1
    %s493 = scalar_lea.sflag [#allocation4], 1
    %494 = vsyncpa %s493, 1

</llo_original>
